<compile_context>
chip_gen: v7x
topology: tpu7x:2x2x1
jax: 0.10.0
libtpu: 0.0.40
codegen_flags: <defaults>
</compile_context>

<pallas_src>
import math

import jax
import jax.numpy as jnp
from jax import lax
from jax.experimental import pallas as pl
from jax.experimental.pallas import tpu as pltpu


def _round_up(x: int, m: int) -> int:
    return (x + m - 1) // m * m


_TM_MAX = 256  # query-row tile (multiple of 8)


def _vmem_capacity_bytes() -> int:
    """Per-core VMEM capacity; conservative fallback if the query fails."""
    try:
        return int(pltpu.get_tpu_info().vmem_capacity_bytes)
    except Exception:
        return 64 * 1024 * 1024  # v7x per-TensorCore VMEM (smallest generation)


def _est_vmem_bytes(tm: int, npad: int, Dp: int, key_itemsize: int) -> int:
    """Rough per-step live set: double-buffered keys + f32 slabs + class row + out."""
    keys = 2 * npad * Dp * key_itemsize          # resident keys (double-buffered)
    slabs = 5 * tm * npad * 4                    # gram / e / mask-select temps (f32)
    cls = 2 * npad * 4                           # class-id row
    out = 2 * tm * 128 * 4                       # lane-dense output tile
    return keys + slabs + cls + out


def _pick_tiling(N: int, Dp: int, key_itemsize: int, vmem_cap: int):
    """Choose (tm, N_pad) so the per-step live set fits ~35% of per-core VMEM."""
    budget = int(0.35 * vmem_cap)
    if N <= _TM_MAX:
        tm = _round_up(max(N, 8), 8)
        return tm, tm

    tm = _TM_MAX
    while tm > 8 and _est_vmem_bytes(tm, _round_up(N, tm), Dp, key_itemsize) > budget:
        tm //= 2
    return tm, _round_up(N, tm)


def _make_cmc_kernel(N_pad: int, Dp: int, tm: int, num_modalities: int,
                     temperature: float, pad_rows: int):
    n = int(num_modalities)
    inv_t2 = 1.0 / (float(temperature) * float(temperature))   # constant shift
    pad_term = float(pad_rows) * math.exp(-inv_t2)              # padded-col row-sum
    n_is_pow2 = (n & (n - 1)) == 0

    def mod_n(x):
        return (x & (n - 1)) if n_is_pow2 else (x % n)

    def cmc_kernel(r_ref, cls_ref, out_ref):
        i0 = pl.multiple_of(pl.program_id(0) * tm, tm)

        # Keys are pre-normalized and pre-scaled by 1/t in the wrapper; the
        # query block is just a slice of the resident key matrix.
        q = r_ref[pl.ds(i0, tm), :]                  # (tm, Dp)
        keys = r_ref[...]                            # (N_pad, Dp)

        # gram[i, j] = cos(i, j) / t^2 ; contract the last axis of both
        # operands directly on the MXU (no materialized transpose).
        gram = lax.dot_general(q, keys, (((1,), (1,)), ((), ())),
                               preferred_element_type=jnp.float32)  # (tm, N_pad)

        # Constant shift cancels in log(denom) - log(nom); avoids f32 overflow
        # for small temperatures; diag ~ exp(0)=1; each zero-padded key column
        # contributes exactly exp(-1/t^2).
        e = jnp.exp(gram - inv_t2)

        jj = lax.broadcasted_iota(jnp.int32, (1, N_pad), 1)
        ii = lax.broadcasted_iota(jnp.int32, (tm, 1), 0) + i0
        # Padded columns carry a sentinel class id, so they never match.
        same_class = mod_n(ii) == cls_ref[...]                      # (tm, N_pad)
        pos_mask = jnp.logical_and(same_class, ii != jj)

        # positives: same residue class mod n, excluding the diagonal.
        nom = jnp.sum(jnp.where(pos_mask, e, 0.0), axis=1, keepdims=True)
        # denominator (valid j with a different class) = total - positives
        # - diagonal (exp(0)=1) - zero-padded key columns (exp(-1/t^2) each).
        row_sum = jnp.sum(e, axis=1, keepdims=True)
        denom = row_sum - nom - 1.0 - pad_term

        losses = jnp.log(denom) - jnp.log(nom)                      # (tm, 1)
        out_ref[...] = jnp.broadcast_to(losses, (tm, 128))

    return cmc_kernel


def cmc_loss_pallas(modalities, batch_size: int, temperature: float,
                    num_modalities: int, use_bf16_matmul: bool = False):
    """modalities: list of (batch_size, D) arrays (one per modality)."""
    assert num_modalities >= 2, "CMC loss needs >= 2 modalities (no positives otherwise)"
    r = jnp.concatenate(modalities, axis=0).astype(jnp.float32)     # (N, D)
    N, D = r.shape
    assert N == batch_size * num_modalities

    # Hoisted (once, in the wrapper): L2-normalize each row and fold in 1/t, so
    # the kernel is matmul + exp + masked reductions only.
    norm = jnp.sqrt(jnp.sum(r * r, axis=1, keepdims=True))
    r_hat = r * ((1.0 / float(temperature)) / jnp.maximum(norm, 1e-8))

    mm_dtype = jnp.bfloat16 if use_bf16_matmul else jnp.float32
    key_itemsize = 2 if use_bf16_matmul else 4

    Dp = _round_up(D, 128)
    vmem_cap = _vmem_capacity_bytes()
    tm, N_pad = _pick_tiling(N, Dp, key_itemsize, vmem_cap)
    grid = N_pad // tm

    # Zero padding: extra feature columns change no dot products; extra key
    # rows each contribute exactly exp(-1/t^2) to the row sums (subtracted
    # in-kernel) and carry a sentinel class id so they never count as
    # positives; extra query rows are never read back.
    r_p = jnp.pad(r_hat, ((0, N_pad - N), (0, Dp - D))).astype(mm_dtype)

    j = jnp.arange(N_pad, dtype=jnp.int32)
    cls_row = jnp.where(j < N, j % num_modalities, num_modalities)
    cls_row = cls_row.astype(jnp.int32)[None, :]                    # (1, N_pad)

    kernel = _make_cmc_kernel(N_pad, Dp, tm, num_modalities, temperature,
                              pad_rows=N_pad - N)

    est_vmem = _est_vmem_bytes(tm, N_pad, Dp, key_itemsize)
    vmem_limit = None
    if est_vmem > 12 * 1024 * 1024:
        vmem_limit = min(int(0.9 * vmem_cap),
                         max(2 * est_vmem, 32 * 1024 * 1024))

    per_row = pl.pallas_call(
        kernel,
        out_shape=jax.ShapeDtypeStruct((N_pad, 128), jnp.float32),
        grid_spec=pltpu.PrefetchScalarGridSpec(
            num_scalar_prefetch=0,
            grid=(grid,),
            in_specs=[
                pl.BlockSpec((N_pad, Dp), lambda i: (0, 0)),   # resident keys
                pl.BlockSpec((1, N_pad), lambda i: (0, 0)),    # class-id row
            ],
            out_specs=pl.BlockSpec((tm, 128), lambda i: (i, 0)),   # lane-dense
        ),
        compiler_params=pltpu.CompilerParams(
            dimension_semantics=("parallel",),
            vmem_limit_bytes=vmem_limit),
    )(r_p, cls_row)

    return jnp.sum(per_row[:N, 0]) / N


def cmc_loss_ref(modalities, batch_size, temperature, num_modalities):
    """Pure-JAX reference mirroring the PyTorch forward (first-call semantics)."""
    N = batch_size * num_modalities
    r = jnp.concatenate(modalities, axis=0).astype(jnp.float32)
    norm = jnp.sqrt(jnp.sum(r * r, axis=1, keepdims=True))
    cos = (r @ r.T) / jnp.maximum(norm * norm.T, 1e-8)
    sim = cos / temperature
    ii = jnp.arange(N)[:, None]
    jj = jnp.arange(N)[None, :]
    same_class = ((ii - jj) % num_modalities) == 0
    mask_denom = jnp.logical_not(same_class)
    mask_pos = jnp.logical_and(same_class, ii != jj)
    e = jnp.exp(sim / temperature)
    nominator = jnp.sum(jnp.where(mask_pos, e, 0.0), axis=1)
    denominator = jnp.sum(jnp.where(mask_denom, e, 0.0), axis=1)
    return jnp.sum(-jnp.log(nominator / denominator)) / N


if __name__ == "__main__":
    batch_size = 8
    num_modalities = 2
    temperature = 0.5
    feature_dim = 32

    key = jax.random.PRNGKey(0)
    keys = jax.random.split(key, num_modalities)
    modalities = [
        jax.random.normal(k, (batch_size, feature_dim), dtype=jnp.float32)
        for k in keys
    ]

    loss = cmc_loss_pallas(modalities, batch_size, temperature, num_modalities)
    loss = jax.block_until_ready(loss)

    ref = cmc_loss_ref(modalities, batch_size, temperature, num_modalities)
    assert jnp.allclose(loss, ref, rtol=1e-4, atol=1e-4), (loss, ref)

    print("KERNEL_OK")
</pallas_src>

<mosaic_0001>
module attributes {stable_mosaic.version = 11 : i64} {
  func.func @cmc_kernel(%arg0: i32, %arg1: memref<16x128xf32, #tpu.memory_space<vmem>>, %arg2: memref<1x16xi32, #tpu.memory_space<vmem>>, %arg3: memref<16x128xf32, #tpu.memory_space<vmem>>) attributes {dimension_semantics = [#tpu.dimension_semantics<parallel>], iteration_bounds = array<i64: 1>, scalar_prefetch = 0 : i64, scratch_operands = 0 : i64, tpu.core_type = #tpu.core_type<tc>, window_params = [{pipeline_mode = #tpu.pipeline_mode<synchronous>, transform_indices = @transform_0, window_bounds = array<i64: 16, 128>}, {pipeline_mode = #tpu.pipeline_mode<synchronous>, transform_indices = @transform_1, window_bounds = array<i64: 1, 16>}, {transform_indices = @transform_2, window_bounds = array<i64: 16, 128>}]} {
    %c16_i32 = arith.constant 16 : i32
    %0 = arith.muli %arg0, %c16_i32 : i32
    %1 = tpu.assume_multiple %0, 16 : i32
    %2 = arith.index_cast %1 : i32 to index
    %c0 = arith.constant 0 : index
    %3 = vector.load %arg1[%2, %c0] : memref<16x128xf32, #tpu.memory_space<vmem>>, vector<16x128xf32>
    %c0_0 = arith.constant 0 : index
    %c0_1 = arith.constant 0 : index
    %4 = vector.load %arg1[%c0_0, %c0_1] : memref<16x128xf32, #tpu.memory_space<vmem>>, vector<16x128xf32>
    %cst = arith.constant dense<0.000000e+00> : vector<16x16xf32>
    %5 = tpu.matmul %3, %4, %cst {dimension_numbers = #tpu.dot_dimension_numbers<[1], [1], [0], [0], [0, 0, 1, 0], [], []>} : vector<16x128xf32>, vector<16x128xf32>, vector<16x16xf32> -> vector<16x16xf32>
    %cst_2 = arith.constant 4.000000e+00 : f32
    %6 = vector.broadcast %cst_2 : f32 to vector<16x16xf32>
    %7 = arith.subf %5, %6 : vector<16x16xf32>
    %8 = math.exp %7 : vector<16x16xf32>
    %9 = tpu.iota {dimensions = array<i32: 1>} : vector<1x16xi32>
    %10 = tpu.iota {dimensions = array<i32: 0>} : vector<16x1xi32>
    %11 = vector.broadcast %1 : i32 to vector<16x1xi32>
    %12 = arith.addi %10, %11 : vector<16x1xi32>
    %c1_i32 = arith.constant 1 : i32
    %13 = vector.broadcast %c1_i32 : i32 to vector<16x1xi32>
    %14 = arith.andi %12, %13 : vector<16x1xi32>
    %c0_3 = arith.constant 0 : index
    %c0_4 = arith.constant 0 : index
    %15 = vector.load %arg2[%c0_3, %c0_4] : memref<1x16xi32, #tpu.memory_space<vmem>>, vector<1x16xi32>
    %16 = vector.broadcast %14 : vector<16x1xi32> to vector<16x16xi32>
    %17 = vector.broadcast %15 : vector<1x16xi32> to vector<16x16xi32>
    %18 = arith.cmpi eq, %16, %17 : vector<16x16xi32>
    %19 = vector.broadcast %12 : vector<16x1xi32> to vector<16x16xi32>
    %20 = vector.broadcast %9 : vector<1x16xi32> to vector<16x16xi32>
    %21 = arith.cmpi ne, %19, %20 : vector<16x16xi32>
    %22 = arith.andi %18, %21 : vector<16x16xi1>
    %cst_5 = arith.constant 0.000000e+00 : f32
    %23 = vector.broadcast %cst_5 : f32 to vector<16x16xf32>
    %24 = arith.select %22, %8, %23 : vector<16x16xi1>, vector<16x16xf32>
    %cst_6 = arith.constant dense<0.000000e+00> : vector<16xf32>
    %25 = vector.multi_reduction <add>, %24, %cst_6 [1] : vector<16x16xf32> to vector<16xf32>
    %26 = vector.shape_cast %25 : vector<16xf32> to vector<16x1xf32>
    %cst_7 = arith.constant dense<0.000000e+00> : vector<16xf32>
    %27 = vector.multi_reduction <add>, %8, %cst_7 [1] : vector<16x16xf32> to vector<16xf32>
    %28 = vector.shape_cast %27 : vector<16xf32> to vector<16x1xf32>
    %29 = arith.subf %28, %26 : vector<16x1xf32>
    %cst_8 = arith.constant 1.000000e+00 : f32
    %30 = vector.broadcast %cst_8 : f32 to vector<16x1xf32>
    %31 = arith.subf %29, %30 : vector<16x1xf32>
    %cst_9 = arith.constant 0.000000e+00 : f32
    %32 = vector.broadcast %cst_9 : f32 to vector<16x1xf32>
    %33 = arith.subf %31, %32 : vector<16x1xf32>
    %34 = math.log %33 : vector<16x1xf32>
    %35 = math.log %26 : vector<16x1xf32>
    %36 = arith.subf %34, %35 : vector<16x1xf32>
    %37 = vector.shape_cast %36 : vector<16x1xf32> to vector<16x1xf32>
    %38 = vector.broadcast %37 : vector<16x1xf32> to vector<16x128xf32>
    %c0_10 = arith.constant 0 : index
    %c0_11 = arith.constant 0 : index
    %39 = vector.load %arg3[%c0_10, %c0_11] : memref<16x128xf32, #tpu.memory_space<vmem>>, vector<16x128xf32>
    tpu.vector_store %arg3[%c0_10, %c0_11], %38 {strides = array<i32>} : memref<16x128xf32, #tpu.memory_space<vmem>>, vector<16x128xf32>,
    return
  }
  func.func @transform_0(%arg0: i32) -> (i32, i32) {
    %c0_i32 = arith.constant 0 : i32
    %c0_i32_0 = arith.constant 0 : i32
    %c0_i32_1 = arith.constant 0 : i32
    return %c0_i32, %c0_i32_0 : i32, i32
  }
  func.func @transform_1(%arg0: i32) -> (i32, i32) {
    %c0_i32 = arith.constant 0 : i32
    %c0_i32_0 = arith.constant 0 : i32
    %c0_i32_1 = arith.constant 0 : i32
    return %c0_i32, %c0_i32_0 : i32, i32
  }
  func.func @transform_2(%arg0: i32) -> (i32, i32) {
    %c0_i32 = arith.constant 0 : i32
    %c0_i32_0 = arith.constant 0 : i32
    return %arg0, %c0_i32 : i32, i32
  }
}

</mosaic_0001>

<llo_original>
// kernel: tpu_custom_call.1
$region0: #{tpu_custom_call.1}
  #allocation0 [shape = 'u32[]', space=smem, size = 0x4, offset = 0x4, fixed_abs, tag = 'smem constant byte address 0x4 - core index']
  #allocation1 [shape = 'u32[144,128]{1,0:T(1,128)}', space=vmem, size = 0x12000, scoped, tag = 'internal scratch']
  %s0 = inlined_call_operand.hbm [shape: f32[16,128], index: 0, kind: input, shape index: {}]
  %s1 = inlined_call_operand.vmem [shape: s32[1,16], index: 1, kind: input, shape index: {}]
  %s2 = inlined_call_operand.hbm [shape: f32[16,128], index: 2, kind: output, shape index: {}]
  %s3 = sld [smem:[#allocation0]]
  $region22: #{tpu_custom_call.1} parent=0
    _
  %s5 = ssub.s32 1, %s3
  %s6 = scalar_select 0, %s5, %s3
  $region1: #{tpu_custom_call.1} parent=0
    #allocation2 [shape = 'u8[8192]{0}', space=vmem, size = 0x2000, scoped, tag = 'input window, operand 0, single buffered']
    #allocation3 [shape = 's32[1]{0}', space=sflag, size = 0x4, scoped, tag = 'scoped memory for tpu_custom_call.1']
    #allocation4 [shape = 's32[1]{0}', space=sflag, size = 0x4, scoped, tag = 'scoped memory for tpu_custom_call.1']
    #allocation5 [shape = 'u8[8192]{0}', space=vmem, size = 0x2000, scoped, tag = 'output window, operand 0, single buffered']
    %7 = vsyncpa [#allocation3], 0
    %8 = vsyncpa [#allocation4], 0
    // Predicated region
    $region2: #{tpu_custom_call.1} parent=1 // pred_check
      _
    $region3: #{tpu_custom_call.1} parent=1 // pred_check_branch
      %10 = sbr.rel (0) target = $region5
    $region4: #{tpu_custom_call.1} parent=1 // pred_region
      %s12 = ssub.s32 256, 256
      %13 = vsyncadd [#allocation3], %s12
      %s14 = sshll.u32 [#allocation2], 4
      %s15 = int_to_ptr.vmem [resolvable:$true] %s14
      %20 = dma.hbm_to_vmem [thread:$0]  %s0, 256, %s15, [#allocation3], 128, 128, 8
    $region5: #{tpu_custom_call.1} parent=1 // pred_fallthru
      _
    // Predicated region
    $region6: #{tpu_custom_call.1} parent=1 // pred_check
      _
    $region7: #{tpu_custom_call.1} parent=1 // pred_check_branch
      %22 = sbr.rel (0) target = $region9
    $region8: #{tpu_custom_call.1} parent=1 // pred_region
      _
    $region9: #{tpu_custom_call.1} parent=1 // pred_fallthru
      _
    // Predicated region
    $region10: #{tpu_custom_call.1} parent=1 // pred_check
      _
    $region11: #{tpu_custom_call.1} parent=1 // pred_check_branch
      %24 = sbr.rel (0) target = $region13
    $region12: #{tpu_custom_call.1} parent=1 // pred_region
      %25 = dma.done [#allocation3], 256
    $region13: #{tpu_custom_call.1} parent=1 // pred_fallthru
      _
    %s26 = smul.u32 0, 16
    %s27 = scalar_lea.vmem [#allocation2], %s26
    %v28 = vld [vmem:[%s27] sm:$0xff]
    %v29 = vld [vmem:[%s27 + $0x8] sm:$0xff]
    %v30 = vld [vmem:[#allocation2] sm:$0xff]
    %v31 = vld [vmem:[#allocation2 + $0x8] sm:$0xff]
    %32 = vmatprep.subr.mxu0 0.0
    %33 = vmatpush1.xpose.msra.mxu0 %v30
    %34 = vmatprep.subr.mxu0 0.0
    %35 = vmatpush1.xpose.msra.mxu0 %v31
    %36 = vmatprep.subr.mxu0 0.0
    %37 = vmatpush1.xpose.msra.mxu0 0.0
    %38 = vmatprep.subr.mxu0 0.0
    %39 = vmatpush1.xpose.msra.mxu0 0.0
    %40 = vmatprep.subr.mxu0 0.0
    %41 = vmatpush1.xpose.msra.mxu0 0.0
    %42 = vmatprep.subr.mxu0 0.0
    %43 = vmatpush1.xpose.msra.mxu0 0.0
    %44 = vmatprep.subr.mxu0 0.0
    %45 = vmatpush1.xpose.msra.mxu0 0.0
    %46 = vmatprep.subr.mxu0 0.0
    %47 = vmatpush1.xpose.msra.mxu0 0.0
    %48 = vmatprep.subr.mxu0 0.0
    %49 = vmatpush1.xpose.msra.mxu0 0.0
    %50 = vmatprep.subr.mxu0 0.0
    %51 = vmatpush1.xpose.msra.mxu0 0.0
    %52 = vmatprep.subr.mxu0 0.0
    %53 = vmatpush1.xpose.msra.mxu0 0.0
    %54 = vmatprep.subr.mxu0 0.0
    %55 = vmatpush1.xpose.msra.mxu0 0.0
    %56 = vmatprep.subr.mxu0 0.0
    %57 = vmatpush1.xpose.msra.mxu0 0.0
    %58 = vmatprep.subr.mxu0 0.0
    %59 = vmatpush1.xpose.msra.mxu0 0.0
    %60 = vmatprep.subr.mxu0 0.0
    %61 = vmatpush1.xpose.msra.mxu0 0.0
    %62 = vmatprep.subr.mxu0 0.0
    %63 = vmatpush1.xpose.msra.mxu0 0.0
    %64 = vmatprep.subr.mxu0 0.0
    %65 = vmatpush1.xpose.msra.mxu0 0.0
    %66 = vmatprep.subr.mxu0 0.0
    %67 = vmatpush1.xpose.msra.mxu0 0.0
    %68 = vmatprep.subr.mxu0 0.0
    %69 = vmatpush1.xpose.msra.mxu0 0.0
    %70 = vmatprep.subr.mxu0 0.0
    %71 = vmatpush1.xpose.msra.mxu0 0.0
    %72 = vmatprep.subr.mxu0 0.0
    %73 = vmatpush1.xpose.msra.mxu0 0.0
    %74 = vmatprep.subr.mxu0 0.0
    %75 = vmatpush1.xpose.msra.mxu0 0.0
    %76 = vmatprep.subr.mxu0 0.0
    %77 = vmatpush1.xpose.msra.mxu0 0.0
    %78 = vmatprep.subr.mxu0 0.0
    %79 = vmatpush1.xpose.msra.mxu0 0.0
    %80 = vmatprep.subr.mxu0 0.0
    %81 = vmatpush1.xpose.msra.mxu0 0.0
    %82 = vmatprep.subr.mxu0 0.0
    %83 = vmatpush1.xpose.msra.mxu0 0.0
    %84 = vmatprep.subr.mxu0 0.0
    %85 = vmatpush1.xpose.msra.mxu0 0.0
    %86 = vmatprep.subr.mxu0 0.0
    %87 = vmatpush1.xpose.msra.mxu0 0.0
    %88 = vmatprep.subr.mxu0 0.0
    %89 = vmatpush1.xpose.msra.mxu0 0.0
    %90 = vmatprep.subr.mxu0 0.0
    %91 = vmatpush1.xpose.msra.mxu0 0.0
    %92 = vmatprep.subr.mxu0 0.0
    %93 = vmatpush1.xpose.msra.mxu0 0.0
    %94 = vmatprep.subr.mxu0 0.0
    %95 = vmatpush1.xpose.msra.mxu0 0.0
    %96 = vmatprep.mubr.f32.mxu0 0.0
    %97 = vmatmul.mubr.f32.gmra.mrb[0].mxu0 %v28
    %v98 = vpop.f32.mrb[0].mxu0
    %v99 = vadd.f32 0.0, %v98
    %v100 = vpop.f32.mrb[0].mxu0
    %101 = vmatprep.mubr.f32.mxu0 0.0
    %102 = vmatmul.mubr.f32.gmra.mrb[0].mxu0 %v29
    %v103 = vpop.f32.mrb[0].mxu0
    %v104 = vadd.f32 0.0, %v103
    %v105 = vpop.f32.mrb[0].mxu0
    %106 = vdwg.mxu0
    %v107 = vsub.f32 %v99, 4.0
    %v108 = vsub.f32 %v104, 4.0
    %v109 = vmul.f32 %v107, 1.442695
    %v110 = vpow.pop %v109
    %v111 = vmul.f32 %v108, 1.442695
    %v112 = vpow.pop %v111
    %v113 = vlaneseq
    %v114 = vand.u32 %v113, 127
    %v115 = vlaneseq
    %v116 = vshrl.u32 %v115, 7
    %v117 = vadd.s32 %v116, 8
    %v118 = vstv %s26
    %v119 = vadd.s32 %v116, %v118
    %v120 = vadd.s32 %v117, %v118
    %v121 = vand.u32 %v119, 1
    %v122 = vand.u32 %v120, 1
    %v123 = vld [vmem:[%s1] sm:$0x1]
    %v124 = vlaneseq
    %v125 = vshrl.u32 %v124, 7
    %v126 = vsub.s32 0, %v125
    %v127 = vrot.slane %v123, %v126
    %vm128 = vcmp.eq.s32.totalorder %v121, %v127
    %vm129 = vcmp.eq.s32.totalorder %v122, %v127
    %vm130 = vcmp.ne.s32.totalorder %v119, %v114
    %vm131 = vcmp.ne.s32.totalorder %v120, %v114
    %vm132 = vmand %vm128, %vm130
    %vm133 = vmand %vm129, %vm131
    %v134 = vsel %vm132, %v110, 0.0
    %v135 = vsel %vm133, %v112, 0.0
    %vm136 = vcmask 130048
    %v137 = vsel %vm136, %v134, 0.0
    %138 = vadd.xlane.f32.xlu0 %v137
    %v139 = vpop.xlane.xlu0 %138
    %v140 = vsel %vm136, %v135, 0.0
    %141 = vadd.xlane.f32.xlu0 %v140
    %v142 = vpop.xlane.xlu0 %141
    %v143 = vsel %vm136, %v110, 0.0
    %144 = vadd.xlane.f32.xlu0 %v143
    %v145 = vpop.xlane.xlu0 %144
    %v146 = vsel %vm136, %v112, 0.0
    %147 = vadd.xlane.f32.xlu0 %v146
    %v148 = vpop.xlane.xlu0 %147
    %v149 = vsub.f32 %v145, %v139
    %v150 = vsub.f32 %v148, %v142
    %v151 = vsub.f32 %v149, 1.0
    %v152 = vsub.f32 %v150, 1.0
    %v153 = vlog2.pop %v151
    %v154 = vmul.f32 %v153, 0.6931472
    %v155 = vlog2.pop %v152
    %v156 = vmul.f32 %v155, 0.6931472
    %v157 = vlog2.pop %v139
    %v158 = vmul.f32 %v157, 0.6931472
    %v159 = vlog2.pop %v142
    %v160 = vmul.f32 %v159, 0.6931472
    %v161 = vsub.f32 %v154, %v158
    %v162 = vsub.f32 %v156, %v160
    %163 = vst [vmem:[#allocation5] sm:$0xff] %v161
    %164 = vst [vmem:[#allocation5 + $0x8] sm:$0xff] %v162
    // Predicated region
    $region14: #{tpu_custom_call.1} parent=1 // pred_check
      _
    $region15: #{tpu_custom_call.1} parent=1 // pred_check_branch
      %166 = sbr.rel (0) target = $region17
    $region16: #{tpu_custom_call.1} parent=1 // pred_region
      %s168 = ssub.s32 256, 256
      %169 = vsyncadd [#allocation4], %s168
      %s170 = sshll.u32 [#allocation5], 4
      %s171 = int_to_ptr.vmem [resolvable:$true] %s170
      %176 = dma.vmem_to_hbm [thread:$0]  %s171, 256, %s2, [#allocation4], 128, 128, 8
    $region17: #{tpu_custom_call.1} parent=1 // pred_fallthru
      _
    // Predicated region
    $region18: #{tpu_custom_call.1} parent=1 // pred_check
      _
    $region19: #{tpu_custom_call.1} parent=1 // pred_check_branch
      %178 = sbr.rel (0) target = $region21
    $region20: #{tpu_custom_call.1} parent=1 // pred_region
      %179 = dma.done [#allocation4], 256
    $region21: #{tpu_custom_call.1} parent=1 // pred_fallthru
      _
    %180 = vsyncpa [#allocation3], 1
    %181 = vsyncpa [#allocation4], 1

</llo_original>
